<compile_context>
chip_gen: v6e
topology: v6e:2x2x1
jax: 0.10.0
libtpu: 0.0.40
codegen_flags: <defaults>
</compile_context>

<pallas_src>
import functools
import numpy as np
import jax
import jax.numpy as jnp
from jax.experimental import pallas as pl
from jax.experimental.pallas import tpu as pltpu

MXU_BF16 = True          # bf16 MXU operands (f32 accumulation) in the generic linear
LIN_TM = 1024            # row tile for the generic linear
MLP_TM = 1024            # row tile for the fused MLP
SP_TM = 512              # row tile for the fused self-tensor-product kernel


# ----------------------------------------------------------------------------
# In-kernel helpers (traced inside Pallas kernel bodies)
# ----------------------------------------------------------------------------
def _leaky(x):
    return jnp.where(x >= 0, x, 0.1 * x)


def _mlp_inline(x, wdir, w1, b1, w2, b2, w3, b3):
    """MLP(x) = lin_direct(x) + l3(leaky(l2(leaky(l1(x))))). (No +x residual.)"""
    h = _leaky(jnp.dot(x, w1, preferred_element_type=jnp.float32) + b1)
    h = _leaky(jnp.dot(h, w2, preferred_element_type=jnp.float32) + b2)
    h = jnp.dot(h, w3, preferred_element_type=jnp.float32) + b3
    return jnp.dot(x, wdir, preferred_element_type=jnp.float32) + h


def _radial_and_gate(r, r0):
    """r: (N, 3) displacement. Returns rad8 (N, 8) and gated unit-ish vec rs (N, 3)."""
    # TODO(synk): exact radial basis not given; 8 sine bumps with a cosine cutoff.
    d = jnp.sqrt(jnp.sum(r * r, axis=-1, keepdims=True) + 1e-12)
    xn = jnp.clip(d / r0, 0.0, 1.0)
    kvec = (jax.lax.broadcasted_iota(jnp.int32, (1, 8), 1) + 1).astype(jnp.float32)
    cutoff = 0.5 * (jnp.cos(jnp.pi * xn) + 1.0)
    rad8 = jnp.sin(jnp.pi * xn * kvec) * cutoff
    # TODO(synk): tens_sigmoid form not given; equivariant gate x*(2*sigmoid(|x|)-1)/|x|.
    rr = r * (7.0 / r0)
    nn = jnp.sqrt(jnp.sum(rr * rr, axis=-1, keepdims=True) + 1e-12)
    rs = rr * (2.0 * jax.nn.sigmoid(nn) - 1.0) / nn
    return rad8, rs


def _bee_project(l0, l1, l2, r0, r1, r2, wa, wv, wd, C):
    """The 13 Bee tensor products followed by the (fused) Y_* projections.

    l0/r0: (N, C);  l1/r1: list of 3 (N, C);  l2/r2: list of 9 (N, C).
    wa: (3C, dim_a) = [W_000; W_110; W_220]
    wv: (5C, dim_v) = [W_011; W_101; W_121; W_211; W_111]
    wd: (5C, dim_d) = [W_022; W_202; W_112; W_222; W_212]
    Returns psi_a (N, dim_a), psi_v list of 3 (N, dim_v), psi_d list of 9 (N, dim_d).
    """
    dot = lambda a, b: jnp.dot(a, b, preferred_element_type=jnp.float32)
    # rank-0
    y000 = l0 * r0
    y110 = l1[0] * r1[0] + l1[1] * r1[1] + l1[2] * r1[2]
    y220 = sum(l2[k] * r2[k] for k in range(9))
    psi_a = dot(y000, wa[0:C]) + dot(y110, wa[C:2 * C]) + dot(y220, wa[2 * C:3 * C])
    # rank-1
    psi_v = []
    for c in range(3):
        p011 = l0 * r1[c]
        p101 = l1[c] * r0
        p121 = sum(l1[j] * r2[3 * j + c] for j in range(3))
        p211 = sum(l2[3 * c + k] * r1[k] for k in range(3))
        a_, b_ = (c + 1) % 3, (c + 2) % 3
        p111 = l1[a_] * r1[b_] - l1[b_] * r1[a_]
        psi_v.append(dot(p011, wv[0:C]) + dot(p101, wv[C:2 * C]) + dot(p121, wv[2 * C:3 * C])
                     + dot(p211, wv[3 * C:4 * C]) + dot(p111, wv[4 * C:5 * C]))
    # rank-2
    psi_d = []
    for i in range(3):
        for j in range(3):
            p022 = l0 * r2[3 * i + j]
            p202 = l2[3 * i + j] * r0
            p112 = l1[i] * r1[j]
            p222 = sum(l2[3 * i + k] * r2[3 * k + j] for k in range(3))
            a_, b_ = (j + 1) % 3, (j + 2) % 3
            # TODO(synk): exact 2x1->2 Bee product unknown; row-i cross product used.
            p212 = l2[3 * i + a_] * r1[b_] - l2[3 * i + b_] * r1[a_]
            psi_d.append(dot(p022, wd[0:C]) + dot(p202, wd[C:2 * C]) + dot(p112, wd[2 * C:3 * C])
                         + dot(p222, wd[3 * C:4 * C]) + dot(p212, wd[4 * C:5 * C]))
    return psi_a, psi_v, psi_d


# ----------------------------------------------------------------------------
# Kernel 1: generic linear  out = act(x @ w + b)
# ----------------------------------------------------------------------------
def _linear_kernel(*refs, act, has_bias):
    if has_bias:
        x_ref, w_ref, b_ref, o_ref = refs
    else:
        x_ref, w_ref, o_ref = refs
    x = x_ref[...]
    w = w_ref[...]
    if MXU_BF16:
        x = x.astype(jnp.bfloat16)
        w = w.astype(jnp.bfloat16)
    acc = jnp.dot(x, w, preferred_element_type=jnp.float32)
    if has_bias:
        acc = acc + b_ref[...]
    if act == "leaky_relu":
        acc = _leaky(acc)
    o_ref[...] = acc


@functools.partial(jax.jit, static_argnames=("act",))
def pallas_linear(x, w, b=None, act=None):
    """x: (M, K), w: (K, N), b: (1, N)/None -> (M, N) float32. No padding copies."""
    M, K = x.shape
    _, N = w.shape
    if K < 8 or N < 8:
        # Tiny contracting/output dims (pos/ndisp/residue embeds, pos push):
        # plain XLA — negligible work, avoids degenerate MXU shapes.
        out = jnp.dot(x.astype(jnp.float32), w.astype(jnp.float32),
                      preferred_element_type=jnp.float32)
        if b is not None:
            out = out + b.reshape(1, -1)
        if act == "leaky_relu":
            out = _leaky(out)
        return out
    tm = M if M <= LIN_TM else LIN_TM
    in_specs = [pl.BlockSpec((tm, K), lambda i: (i, 0)),
                pl.BlockSpec((K, N), lambda i: (0, 0))]
    args = [x.astype(jnp.float32), w.astype(jnp.float32)]
    if b is not None:
        in_specs.append(pl.BlockSpec((1, N), lambda i: (0, 0)))
        args.append(b.reshape(1, N).astype(jnp.float32))
    return pl.pallas_call(
        functools.partial(_linear_kernel, act=act, has_bias=b is not None),
        out_shape=jax.ShapeDtypeStruct((M, N), jnp.float32),
        grid=(pl.cdiv(M, tm),),
        in_specs=in_specs,
        out_specs=pl.BlockSpec((tm, N), lambda i: (i, 0)),
        compiler_params=pltpu.CompilerParams(dimension_semantics=("parallel",)),
    )(*args)


# ----------------------------------------------------------------------------
# Kernel 2: fused residual MLP
# ----------------------------------------------------------------------------
def _mlp_kernel(x_ref, wd_ref, w1_ref, b1_ref, w2_ref, b2_ref, w3_ref, b3_ref, o_ref):
    o_ref[...] = _mlp_inline(x_ref[...], wd_ref[...], w1_ref[...], b1_ref[...],
                             w2_ref[...], b2_ref[...], w3_ref[...], b3_ref[...])


@jax.jit
def pallas_mlp(x2, wd, w1, b1, w2, b2, w3, b3):
    M, D = x2.shape
    tm = M if M <= MLP_TM else MLP_TM
    row = lambda i: (i, 0)
    whole = lambda i: (0, 0)
    in_specs = [pl.BlockSpec((tm, D), row)] + \
               [pl.BlockSpec(w.shape, whole) for w in (wd, w1, b1, w2, b2, w3, b3)]
    return pl.pallas_call(
        _mlp_kernel,
        out_shape=jax.ShapeDtypeStruct((M, D), jnp.float32),
        grid=(pl.cdiv(M, tm),),
        in_specs=in_specs,
        out_specs=pl.BlockSpec((tm, D), row),
        compiler_params=pltpu.CompilerParams(dimension_semantics=("parallel",)),
    )(x2, wd, w1, b1, w2, b2, w3, b3)


# ----------------------------------------------------------------------------
# Kernel 3: fused SelfTensProds core (L/R projections + Bee + Y projections)
# ----------------------------------------------------------------------------
def _self_prod_kernel(xa_ref, xv_ref, xd_ref, wlr0_ref, wlr1_ref, wlr2_ref,
                      wya_ref, wyv_ref, wyd_ref, ya_ref, yv_ref, yd_ref):
    C = wlr0_ref.shape[1] // 2
    dv_in = wlr1_ref.shape[0]
    dd_in = wlr2_ref.shape[0]
    xa = xa_ref[...]
    xv = xv_ref[...]
    xd = xd_ref[...]
    lr0 = jnp.dot(xa, wlr0_ref[...], preferred_element_type=jnp.float32)
    l0, r0 = lr0[:, :C], lr0[:, C:]
    wlr1 = wlr1_ref[...]
    wlr2 = wlr2_ref[...]
    l1, r1 = [], []
    for c in range(3):
        lr = jnp.dot(xv[:, c * dv_in:(c + 1) * dv_in], wlr1, preferred_element_type=jnp.float32)
        l1.append(lr[:, :C])
        r1.append(lr[:, C:])
    l2, r2 = [], []
    for k in range(9):
        lr = jnp.dot(xd[:, k * dd_in:(k + 1) * dd_in], wlr2, preferred_element_type=jnp.float32)
        l2.append(lr[:, :C])
        r2.append(lr[:, C:])
    ya, yv, yd = _bee_project(l0, l1, l2, r0, r1, r2,
                              wya_ref[...], wyv_ref[...], wyd_ref[...], C)
    ya_ref[...] = ya
    dv_out = yv_ref.shape[-1] // 3
    dd_out = yd_ref.shape[-1] // 9
    for c in range(3):
        yv_ref[:, c * dv_out:(c + 1) * dv_out] = yv[c]
    for k in range(9):
        yd_ref[:, k * dd_out:(k + 1) * dd_out] = yd[k]


@jax.jit
def fused_self_prods(xa, xvf, xdf, wlr0, wlr1, wlr2, wya, wyv, wyd):
    rows, dim_a = xa.shape
    dv3 = xvf.shape[1]
    dd9 = xdf.shape[1]
    out_da = wya.shape[1]
    out_dv = wyv.shape[1]
    out_dd = wyd.shape[1]
    tm = rows if rows <= SP_TM else SP_TM
    row = lambda i: (i, 0)
    whole = lambda i: (0, 0)
    in_specs = [pl.BlockSpec((tm, dim_a), row),
                pl.BlockSpec((tm, dv3), row),
                pl.BlockSpec((tm, dd9), row)] + \
               [pl.BlockSpec(w.shape, whole) for w in (wlr0, wlr1, wlr2, wya, wyv, wyd)]
    out_shapes = (jax.ShapeDtypeStruct((rows, out_da), jnp.float32),
                  jax.ShapeDtypeStruct((rows, 3 * out_dv), jnp.float32),
                  jax.ShapeDtypeStruct((rows, 9 * out_dd), jnp.float32))
    out_specs = (pl.BlockSpec((tm, out_da), row),
                 pl.BlockSpec((tm, 3 * out_dv), row),
                 pl.BlockSpec((tm, 9 * out_dd), row))
    return pl.pallas_call(
        _self_prod_kernel,
        out_shape=out_shapes,
        grid=(pl.cdiv(rows, tm),),
        in_specs=in_specs,
        out_specs=out_specs,
        compiler_params=pltpu.CompilerParams(dimension_semantics=("parallel",)),
    )(xa, xvf, xdf, wlr0, wlr1, wlr2, wya, wyv, wyd)


# ----------------------------------------------------------------------------
# Kernel 4: fused Messages (dense neighbour block per (batch, node-i))
# ----------------------------------------------------------------------------
def _messages_kernel(rij_ref, mask_ref, xa_ref, xv_ref, xd_ref,
                     wenc_ref, benc_ref, wl0_ref, wl1_ref, wl2_ref,
                     wya_ref, wyv_ref, wyd_ref,
                     wdir_ref, w1_ref, b1_ref, w2_ref, b2_ref, w3_ref, b3_ref,
                     ba_ref, bv_ref, bd_ref, *, r0):
    C = wl0_ref.shape[1]
    dv_in = wl1_ref.shape[0]
    dd_in = wl2_ref.shape[0]
    r = rij_ref[...]          # (N, 3)   displacement to each neighbour j
    mw = mask_ref[...]        # (N, 1)   edge mask
    xa = xa_ref[...]          # (N, dim_a) features of node j (dst)
    xv = xv_ref[...]          # (N, 3*dim_v) component-major
    xd = xd_ref[...]          # (N, 9*dim_d)
    rad8, rs = _radial_and_gate(r, r0)
    rad_enc = jnp.dot(rad8, wenc_ref[...], preferred_element_type=jnp.float32) + benc_ref[...]
    # node (dst) projections into channel space (left operand of Bee)
    l0 = jnp.dot(xa, wl0_ref[...], preferred_element_type=jnp.float32)
    wl1 = wl1_ref[...]
    wl2 = wl2_ref[...]
    l1 = [jnp.dot(xv[:, c * dv_in:(c + 1) * dv_in], wl1, preferred_element_type=jnp.float32)
          for c in range(3)]
    l2 = [jnp.dot(xd[:, k * dd_in:(k + 1) * dd_in], wl2, preferred_element_type=jnp.float32)
          for k in range(9)]
    # edge-side phi tensors (right operand of Bee), built in-VMEM
    phi0 = rad_enc
    phi1 = [rad_enc * rs[:, c:c + 1] for c in range(3)]
    phi2 = [rad_enc * rs[:, i:i + 1] * rs[:, j:j + 1] for i in range(3) for j in range(3)]
    psi_a, psi_v, psi_d = _bee_project(l0, l1, l2, phi0, phi1, phi2,
                                       wya_ref[...], wyv_ref[...], wyd_ref[...], C)
    psi_a = psi_a + _mlp_inline(psi_a, wdir_ref[...], w1_ref[...], b1_ref[...],
                                w2_ref[...], b2_ref[...], w3_ref[...], b3_ref[...])
    # masked edge reduction over neighbours j + 0.1 scaling
    ba_ref[...] = 0.1 * jnp.sum(mw * psi_a, axis=0, keepdims=True)
    dv_out = bv_ref.shape[-1] // 3
    dd_out = bd_ref.shape[-1] // 9
    for c in range(3):
        bv_ref[:, c * dv_out:(c + 1) * dv_out] = 0.1 * jnp.sum(mw * psi_v[c], axis=0, keepdims=True)
    for k in range(9):
        bd_ref[:, k * dd_out:(k + 1) * dd_out] = 0.1 * jnp.sum(mw * psi_d[k], axis=0, keepdims=True)


@functools.partial(jax.jit, static_argnames=("r0",))
def fused_messages(rij, mask4, xa, xvf, xdf, wenc, benc, wl0, wl1, wl2,
                   wya, wyv, wyd, wdir, w1, b1, w2, b2, w3, b3, *, r0):
    B, N = xa.shape[0], xa.shape[1]
    dim_a = xa.shape[2]
    dv3 = xvf.shape[2]
    dd9 = xdf.shape[2]
    out_da = wya.shape[1]
    out_dv = wyv.shape[1]
    out_dd = wyd.shape[1]
    edge = lambda b, i: (b, i, 0, 0)
    node = lambda b, i: (b, 0, 0)
    whole = lambda b, i: (0, 0)
    ws = (wenc, benc, wl0, wl1, wl2, wya, wyv, wyd, wdir, w1, b1, w2, b2, w3, b3)
    in_specs = [pl.BlockSpec((None, None, N, 3), edge),
                pl.BlockSpec((None, None, N, 1), edge),
                pl.BlockSpec((None, N, dim_a), node),
                pl.BlockSpec((None, N, dv3), node),
                pl.BlockSpec((None, N, dd9), node)] + \
               [pl.BlockSpec(w.shape, whole) for w in ws]
    out_shapes = (jax.ShapeDtypeStruct((B, N, 1, out_da), jnp.float32),
                  jax.ShapeDtypeStruct((B, N, 1, 3 * out_dv), jnp.float32),
                  jax.ShapeDtypeStruct((B, N, 1, 9 * out_dd), jnp.float32))
    out_specs = (pl.BlockSpec((None, None, 1, out_da), edge),
                 pl.BlockSpec((None, None, 1, 3 * out_dv), edge),
                 pl.BlockSpec((None, None, 1, 9 * out_dd), edge))
    return pl.pallas_call(
        functools.partial(_messages_kernel, r0=r0),
        out_shape=out_shapes,
        grid=(B, N),
        in_specs=in_specs,
        out_specs=out_specs,
        compiler_params=pltpu.CompilerParams(dimension_semantics=("parallel", "arbitrary")),
    )(rij, mask4, xa, xvf, xdf, *ws)


# ----------------------------------------------------------------------------
# Kernel 5: fused DisplacementTensors
# ----------------------------------------------------------------------------
def _disp_kernel(rij_ref, mask_ref, wrad_ref, brad_ref,
                 wdir_ref, w1_ref, b1_ref, w2_ref, b2_ref, w3_ref, b3_ref,
                 wrv_ref, wrd_ref, aa_ref, av_ref, ad_ref, *, r0):
    r = rij_ref[...]          # (N, 3)
    mw = mask_ref[...]        # (N, 1)
    rad8, rs = _radial_and_gate(r, r0)
    h0 = jnp.dot(rad8, wrad_ref[...], preferred_element_type=jnp.float32) + brad_ref[...]
    phi_a = _mlp_inline(h0, wdir_ref[...], w1_ref[...], b1_ref[...],
                        w2_ref[...], b2_ref[...], w3_ref[...], b3_ref[...])
    wa = mw * phi_a                                        # (N, dim_a), masked
    aa_ref[...] = jnp.sum(wa, axis=0, keepdims=True)
    wrv = wrv_ref[...]
    wrd = wrd_ref[...]
    dv = av_ref.shape[-1] // 3
    dd = ad_ref.shape[-1] // 9
    for c in range(3):
        pv = jnp.dot(wa * rs[:, c:c + 1], wrv, preferred_element_type=jnp.float32)
        av_ref[:, c * dv:(c + 1) * dv] = jnp.sum(pv, axis=0, keepdims=True)
    for i in range(3):
        for j in range(3):
            pd = jnp.dot(wa * rs[:, i:i + 1] * rs[:, j:j + 1], wrd,
                         preferred_element_type=jnp.float32)
            ad_ref[:, (3 * i + j) * dd:(3 * i + j + 1) * dd] = jnp.sum(pd, axis=0, keepdims=True)


@functools.partial(jax.jit, static_argnames=("r0",))
def fused_disp(rij, mask4, wrad, brad, wdir, w1, b1, w2, b2, w3, b3, wrv, wrd, *, r0):
    B, N = rij.shape[0], rij.shape[1]
    dim_a = wrad.shape[1]
    dv = wrv.shape[1]
    dd = wrd.shape[1]
    edge = lambda b, i: (b, i, 0, 0)
    whole = lambda b, i: (0, 0)
    ws = (wrad, brad, wdir, w1, b1, w2, b2, w3, b3, wrv, wrd)
    in_specs = [pl.BlockSpec((None, None, N, 3), edge),
                pl.BlockSpec((None, None, N, 1), edge)] + \
               [pl.BlockSpec(w.shape, whole) for w in ws]
    out_shapes = (jax.ShapeDtypeStruct((B, N, 1, dim_a), jnp.float32),
                  jax.ShapeDtypeStruct((B, N, 1, 3 * dv), jnp.float32),
                  jax.ShapeDtypeStruct((B, N, 1, 9 * dd), jnp.float32))
    out_specs = (pl.BlockSpec((None, None, 1, dim_a), edge),
                 pl.BlockSpec((None, None, 1, 3 * dv), edge),
                 pl.BlockSpec((None, None, 1, 9 * dd), edge))
    return pl.pallas_call(
        functools.partial(_disp_kernel, r0=r0),
        out_shape=out_shapes,
        grid=(B, N),
        in_specs=in_specs,
        out_specs=out_specs,
        compiler_params=pltpu.CompilerParams(dimension_semantics=("parallel", "arbitrary")),
    )(rij, mask4, *ws)


# ----------------------------------------------------------------------------
# Kernel 6: amino-chain 1-D conv ('same' padding, no bias), taps in-kernel
# ----------------------------------------------------------------------------
def _conv1d_kernel(x_ref, w_ref, o_ref, *, act):
    x = x_ref[...]                    # (R, L + K - 1, D)
    w = w_ref[...]                    # (K, D, D)
    R, L, _ = o_ref.shape
    K = w.shape[0]
    acc = jnp.zeros(o_ref.shape, jnp.float32)
    for k in range(K):
        wk = jnp.broadcast_to(w[k], (R,) + w[k].shape)
        acc = acc + jnp.einsum("rld,rde->rle", x[:, k:k + L, :], wk,
                               preferred_element_type=jnp.float32)
    if act == "leaky_relu":
        acc = _leaky(acc)
    o_ref[...] = acc


@functools.partial(jax.jit, static_argnames=("act",))
def pallas_conv1d(xf, w, act=None):
    """xf: (R, L, D) rows = batch*tensor-components; conv along L."""
    R, L, D = xf.shape
    K = w.shape[0]
    pad = K // 2
    xp = jnp.pad(xf, ((0, 0), (pad, pad), (0, 0)))
    return pl.pallas_call(
        functools.partial(_conv1d_kernel, act=act),
        out_shape=jax.ShapeDtypeStruct((R, L, D), jnp.float32),
        grid=(1,),
        in_specs=[pl.BlockSpec((R, L + 2 * pad, D), lambda i: (0, 0, 0)),
                  pl.BlockSpec((K, D, D), lambda i: (0, 0, 0))],
        out_specs=pl.BlockSpec((R, L, D), lambda i: (0, 0, 0)),
    )(xp, w)


# ----------------------------------------------------------------------------
# Parameter init helpers
# ----------------------------------------------------------------------------
class KeyGen:
    def __init__(self, seed):
        self.key = jax.random.PRNGKey(seed)

    def __call__(self):
        self.key, sub = jax.random.split(self.key)
        return sub


class TensorRandGen:
    def __init__(self, seed):
        self.key = jax.random.PRNGKey(seed)
        self.count = 0

    def randn(self, ind, shape):
        self.count += 1
        k = jax.random.fold_in(self.key, self.count)
        return jax.random.normal(k, tuple(shape) + (3,) * ind, dtype=jnp.float32)


def _randw(kg, din, dout):
    return jax.random.normal(kg(), (din, dout), jnp.float32) / np.sqrt(float(din))


def init_tens_linear(kg, din, dout):
    return {"W": _randw(kg, din, dout)}


def init_linear(kg, din, dout, bias=True):
    p = {"W": _randw(kg, din, dout)}
    if bias:
        p["b"] = jnp.zeros((1, dout), jnp.float32)
    return p


def init_mlp(kg, dim):
    return {"direct": init_linear(kg, dim, dim, bias=False),
            "l1": init_linear(kg, dim, 2 * dim),
            "l2": init_linear(kg, 2 * dim, 2 * dim),
            "l3": init_linear(kg, 2 * dim, dim)}


def init_tens_prod_submodules(kg, dim_a, dim_v, dim_d, chan):
    # fused Y weights; row order [000,110,220] / [011,101,121,211,111] / [022,202,112,222,212]
    def stack(dout, n):
        return jnp.concatenate([_randw(kg, chan, dout) for _ in range(n)], axis=0)
    return {"Wa": stack(dim_a, 3), "Wv": stack(dim_v, 5), "Wd": stack(dim_d, 5)}


def init_tens_group_norm(dim, ind):
    p = {"gamma": jnp.ones((dim,), jnp.float32)}
    if ind == 0:
        p["beta"] = jnp.zeros((dim,), jnp.float32)
    return p


def init_self_tens_prods(kg, dim_a, dim_v, dim_d, chan):
    def lr(din):  # fused [W_L | W_R]
        return jnp.concatenate([_randw(kg, din, chan), _randw(kg, din, chan)], axis=1)
    return {"WLR0": lr(dim_a), "WLR1": lr(dim_v), "WLR2": lr(dim_d),
            "Y": init_tens_prod_submodules(kg, dim_a, dim_v, dim_d, chan),
            "gn_a": init_tens_group_norm(dim_a, 0),
            "gn_v": init_tens_group_norm(dim_v, 1),
            "gn_d": init_tens_group_norm(dim_d, 2)}


def init_messages(kg, dim_a, dim_v, dim_d, chan):
    return {"WL0": _randw(kg, dim_a, chan), "WL1": _randw(kg, dim_v, chan),
            "WL2": _randw(kg, dim_d, chan),
            "Y": init_tens_prod_submodules(kg, dim_a, dim_v, dim_d, chan),
            "W_enc": _randw(kg, 8, chan), "b_enc": jnp.zeros((1, chan), jnp.float32),
            "mlp_a": init_mlp(kg, dim_a)}


def init_disp_tensors(kg, dim_a, dim_v, dim_d):
    return {"W_rad": _randw(kg, 8, dim_a), "b_rad": jnp.zeros((1, dim_a), jnp.float32),
            "mlp": init_mlp(kg, dim_a),
            "W_rv": _randw(kg, dim_a, dim_v), "W_rd": _randw(kg, dim_a, dim_d)}


def init_tens_conv1d(kg, dim, kernel=7):
    return {"W": jax.random.normal(kg(), (kernel, dim, dim), jnp.float32)
            / np.sqrt(float(kernel * dim))}


# ----------------------------------------------------------------------------
# Functional layers (glue around the Pallas kernels)
# ----------------------------------------------------------------------------
def linear(p, x, act=None):
    lead = x.shape[:-1]
    out = pallas_linear(x.reshape(-1, x.shape[-1]), p["W"], p.get("b"), act=act)
    return out.reshape(lead + (p["W"].shape[1],))


def tens_linear(p, x, ind):
    """TensLinear(ind, din, dout): linear over channels, tensor comps untouched."""
    W = p["W"]
    din, dout = W.shape
    if ind == 0:
        lead = x.shape[:-1]
        return pallas_linear(x.reshape(-1, din), W).reshape(lead + (dout,))
    T = 3 ** ind
    lead = x.shape[: x.ndim - 1 - ind]
    xt = jnp.moveaxis(x.reshape(lead + (din, T)), -2, -1)
    out = pallas_linear(xt.reshape(-1, din), W).reshape(lead + (T, dout))
    out = jnp.moveaxis(out, -1, -2)
    return out.reshape(lead + (dout,) + (3,) * ind)


def tens_sigmoid(ind, x):
    # TODO(synk): exact tens_sigmoid form not given; equivariant gate x*(2*sigmoid(|x|)-1)/|x|.
    if ind == 0:
        return jax.nn.sigmoid(x)
    axes = tuple(range(-ind, 0))
    n = jnp.sqrt(jnp.sum(x * x, axis=axes, keepdims=True) + 1e-12)
    return x * (2.0 * jax.nn.sigmoid(n) - 1.0) / n


def mlp(p, x):
    lead = x.shape[:-1]
    out = pallas_mlp(x.reshape(-1, x.shape[-1]),
                     p["direct"]["W"], p["l1"]["W"], p["l1"]["b"],
                     p["l2"]["W"], p["l2"]["b"], p["l3"]["W"], p["l3"]["b"])
    return out.reshape(lead + (x.shape[-1],))


def init_vector_mlp(kg, dim):
    return {"direct": init_tens_linear(kg, dim, dim),
            "l1": init_tens_linear(kg, dim, 2 * dim),
            "l2": init_tens_linear(kg, 2 * dim, 2 * dim),
            "l3": init_tens_linear(kg, 2 * dim, dim)}


def vector_mlp(p, x):
    h = tens_sigmoid(1, tens_linear(p["l1"], x, 1))
    h = tens_sigmoid(1, tens_linear(p["l2"], h, 1))
    h = tens_linear(p["l3"], h, 1)
    return tens_linear(p["direct"], x, 1) + h


def tens_group_norm(p, x, ind, groups=8, eps=1e-5):
    dim = x.shape[-1] if ind == 0 else x.shape[-1 - ind]
    lead = x.shape[: x.ndim - 1 - ind]
    xg = x.reshape(lead + (groups, dim // groups) + (3,) * ind)
    red = tuple(range(len(lead) + 1, xg.ndim))
    if ind == 0:
        mean = jnp.mean(xg, axis=red, keepdims=True)
        var = jnp.mean((xg - mean) ** 2, axis=red, keepdims=True)
        y = ((xg - mean) / jnp.sqrt(var + eps)).reshape(x.shape)
        return y * p["gamma"] + p["beta"]
    ms = jnp.mean(xg * xg, axis=red, keepdims=True)
    y = (xg / jnp.sqrt(ms + eps)).reshape(x.shape)
    return y * p["gamma"].reshape((dim,) + (1,) * ind)


def tens_conv1d(p, x, ind, act=None):
    B, L, dim = x.shape[0], x.shape[1], x.shape[2]
    T = 3 ** ind
    xf = jnp.moveaxis(x.reshape(B, L, dim, T), 3, 1).reshape(B * T, L, dim)
    out = pallas_conv1d(xf, p["W"], act=act)
    out = jnp.moveaxis(out.reshape(B, T, L, dim), 1, 3)
    if ind == 0:
        return out.reshape(B, L, dim)
    return out.reshape((B, L, dim) + (3,) * ind)


# ----------------------------------------------------------------------------
# Tensor-product / messages / displacement modules
# ----------------------------------------------------------------------------
def self_tens_prods(p, x_a, x_v, x_d, groups=8):
    rest = x_a.shape[:-1]
    dim_a, dim_v, dim_d = x_a.shape[-1], x_v.shape[-2], x_d.shape[-3]
    n = int(np.prod(rest))
    xa = x_a.reshape(n, dim_a)
    xvf = jnp.transpose(x_v.reshape(n, dim_v, 3), (0, 2, 1)).reshape(n, 3 * dim_v)
    xdf = jnp.transpose(x_d.reshape(n, dim_d, 3, 3), (0, 2, 3, 1)).reshape(n, 9 * dim_d)
    ya, yvf, ydf = fused_self_prods(xa, xvf, xdf,
                                    p["WLR0"], p["WLR1"], p["WLR2"],
                                    p["Y"]["Wa"], p["Y"]["Wv"], p["Y"]["Wd"])
    y_a = ya.reshape(rest + (dim_a,))
    y_v = jnp.transpose(yvf.reshape(n, 3, dim_v), (0, 2, 1)).reshape(rest + (dim_v, 3))
    y_d = jnp.transpose(ydf.reshape(n, 3, 3, dim_d), (0, 3, 1, 2)).reshape(rest + (dim_d, 3, 3))
    return (tens_group_norm(p["gn_a"], y_a, 0, groups),
            tens_group_norm(p["gn_v"], y_v, 1, groups),
            tens_group_norm(p["gn_d"], y_d, 2, groups))


def init_local_mlp(kg, dim_a, dim_v, dim_d):
    return {"mlp_a": init_mlp(kg, dim_a), "mlp_v": init_vector_mlp(kg, dim_v),
            "lin_d": init_tens_linear(kg, dim_d, dim_d)}


def local_mlp(p, x_a, x_v, x_d):
    x_a = x_a + mlp(p["mlp_a"], x_a)
    x_v = x_v + vector_mlp(p["mlp_v"], x_v)
    x_d = x_d + jnp.swapaxes(tens_linear(p["lin_d"], x_d, 2), -1, -2)
    return x_a, x_v, x_d


def messages(p, r0, mask4, rij, x_a, x_v, x_d):
    B, N = x_a.shape[0], x_a.shape[1]
    dv, dd = x_v.shape[2], x_d.shape[2]
    xvf = jnp.transpose(x_v, (0, 1, 3, 2)).reshape(B, N, 3 * dv)
    xdf = jnp.transpose(x_d, (0, 1, 3, 4, 2)).reshape(B, N, 9 * dd)
    m = p["mlp_a"]
    Ba, Bv, Bd = fused_messages(rij, mask4, x_a, xvf, xdf,
                                p["W_enc"], p["b_enc"], p["WL0"], p["WL1"], p["WL2"],
                                p["Y"]["Wa"], p["Y"]["Wv"], p["Y"]["Wd"],
                                m["direct"]["W"], m["l1"]["W"], m["l1"]["b"],
                                m["l2"]["W"], m["l2"]["b"], m["l3"]["W"], m["l3"]["b"],
                                r0=r0)
    da = Ba.shape[-1]
    dvo = Bv.shape[-1] // 3
    ddo = Bd.shape[-1] // 9
    B_a = Ba.reshape(B, N, da)
    B_v = jnp.transpose(Bv.reshape(B, N, 3, dvo), (0, 1, 3, 2))
    B_d = jnp.transpose(Bd.reshape(B, N, 3, 3, ddo), (0, 1, 4, 2, 3))
    return B_a, B_v, B_d


def disp_tensors(p, r0, mask4, rij):
    B, N = mask4.shape[0], mask4.shape[1]
    m = p["mlp"]
    Aa, Av, Ad = fused_disp(rij, mask4, p["W_rad"], p["b_rad"],
                            m["direct"]["W"], m["l1"]["W"], m["l1"]["b"],
                            m["l2"]["W"], m["l2"]["b"], m["l3"]["W"], m["l3"]["b"],
                            p["W_rv"], p["W_rd"], r0=r0)
    da = Aa.shape[-1]
    dv = Av.shape[-1] // 3
    dd = Ad.shape[-1] // 9
    A_a = Aa.reshape(B, N, da)
    A_v = jnp.transpose(Av.reshape(B, N, 3, dv), (0, 1, 3, 2))
    A_d = jnp.transpose(Ad.reshape(B, N, 3, 3, dd), (0, 1, 4, 2, 3))
    return A_a, A_v, A_d


# ----------------------------------------------------------------------------
# Geometry helpers (dense graph emulation)
# ----------------------------------------------------------------------------
def boxwrap(box, delta):
    return delta - box * jnp.round(delta / box)


def graph_setup(r_cut, box, pos):
    # TODO(synk): original uses a sparse CUDA radius graph; dense masked adjacency
    # keeps identical reduction semantics for these atom counts.
    B, N, _ = pos.shape
    delta = boxwrap(box, pos[:, None, :, :] - pos[:, :, None, :])   # r_ij[b,i,j] = pos_j - pos_i
    d2 = jnp.sum(delta * delta, axis=-1)
    eye = jnp.eye(N, dtype=bool)[None]
    mask = ((d2 < r_cut * r_cut) & (~eye)).astype(jnp.float32)[..., None]
    return mask, delta


# ----------------------------------------------------------------------------
# Embedding / readin-readout modules
# ----------------------------------------------------------------------------
def init_pos_embed(kg, dim_v):
    return {"lin_v": init_tens_linear(kg, 1, dim_v)}


def pos_embed(p, pos_0, pos_1):
    dpos = 0.1 * (pos_1 - pos_0)[:, :, None, :]
    return tens_linear(p["lin_v"], dpos, 1)


def init_ndisp_embed(kg, dim_v):
    return {"lin_l": init_tens_linear(kg, 2, dim_v), "lin_r": init_tens_linear(kg, 2, dim_v)}


def ndisp_embed(p, pos_0, pos_1):
    delta = 0.1 * jnp.stack([pos_0[:, 1:] - pos_0[:, :-1],
                             pos_1[:, 1:] - pos_1[:, :-1]], axis=2)
    delta_l = jnp.pad(delta, ((0, 0), (0, 1), (0, 0), (0, 0)))
    delta_r = jnp.pad(delta, ((0, 0), (1, 0), (0, 0), (0, 0)))
    return tens_linear(p["lin_l"], delta_l, 1) + tens_linear(p["lin_r"], delta_r, 1)


def init_residue_atom_embed(kg, dim_a, n_types=8):
    return {"emb": 0.1 * jax.random.normal(kg(), (n_types, dim_a), jnp.float32)}


def residue_atom_embed(p, meta):
    # TODO(synk): ResidueAtomEmbed not provided; per-atom-type embedding table.
    return p["emb"][meta["atom_type"]]


def init_residues_encode(kg, dim_v, atoms_per_amino):
    return {"lin": init_tens_linear(kg, atoms_per_amino, dim_v)}


def residues_encode(p, pos, meta):
    # TODO(synk): ResiduesEncodeV2 not provided; per-amino mean position + TensLinear
    # of intra-residue displacements.
    B = pos.shape[0]
    n_am, apa = meta["n_aminos"], meta["atoms_per_amino"]
    pos_r = pos.reshape(B, n_am, apa, 3)
    pos_amino = jnp.mean(pos_r, axis=2)
    rel = 0.1 * (pos_r - pos_amino[:, :, None, :])
    return pos_amino, tens_linear(p["lin"], rel, 1)


def init_lin_amino_map(kg, din, dout):
    return {"lin": init_tens_linear(kg, din, dout)}


def lin_atom_to_amino(p, x, meta, ind):
    # TODO(synk): LinAtomToAmino not provided; per-amino mean pooling then TensLinear.
    B = x.shape[0]
    n_am = meta["n_aminos"]
    one_hot = jax.nn.one_hot(meta["amino_index"], n_am, dtype=jnp.float32)
    counts = jnp.sum(one_hot, axis=0)
    xf = x.reshape(B, x.shape[1], -1)
    pooled = jnp.einsum("am,baf->bmf", one_hot, xf) / counts[None, :, None]
    pooled = pooled.reshape((B, n_am) + x.shape[2:])
    return tens_linear(p["lin"], pooled, ind)


def lin_amino_to_atom(p, y, meta, ind):
    # TODO(synk): LinAminoToAtom not provided; broadcast amino feature to atoms + TensLinear.
    gathered = y[:, meta["amino_index"]]
    return tens_linear(p["lin"], gathered, ind)


# ----------------------------------------------------------------------------
# SubBlock / AminoSubBlock / Block / Generator
# ----------------------------------------------------------------------------
def init_amino_chain_conv(kg, dim_a, dim_v, dim_d):
    return {"a": [init_tens_conv1d(kg, dim_a) for _ in range(3)],
            "v": [init_tens_conv1d(kg, dim_v) for _ in range(2)],
            "d": [init_tens_conv1d(kg, dim_d) for _ in range(2)]}


def amino_chain_conv(p, x_a, x_v, x_d):
    a = tens_conv1d(p["a"][0], x_a, 0, act="leaky_relu")
    a = tens_conv1d(p["a"][1], a, 0, act="leaky_relu")
    a = tens_conv1d(p["a"][2], a, 0)
    v = tens_conv1d(p["v"][0], x_v, 1)
    v = tens_conv1d(p["v"][1], v, 1)
    d = tens_conv1d(p["d"][0], x_d, 2)
    d = tens_conv1d(p["d"][1], d, 2)
    return a, v, d


def init_sub_block(kg, cfg):
    da, dv, dd, ch = cfg["dim_a"], cfg["dim_v"], cfg["dim_d"], cfg["chan"]
    return {"readin_a": init_tens_linear(kg, da, da),
            "readin_v": init_tens_linear(kg, dv, dv),
            "readin_d": init_tens_linear(kg, dd, dd),
            "disp0": init_disp_tensors(kg, da, dv, dd),
            "disp1": init_disp_tensors(kg, da, dv, dd),
            "prods": init_self_tens_prods(kg, da, dv, dd, ch),
            "mlps": init_local_mlp(kg, da, dv, dd)}


def sub_block(p, cfg, xtup, pos0tup, pos1tup):
    x_a, x_v, x_d = xtup
    _, mask0, rij0 = pos0tup
    _, mask1, rij1 = pos1tup
    rc = cfg["r_cut"]
    x_a = tens_linear(p["readin_a"], x_a, 0)
    x_v = tens_linear(p["readin_v"], x_v, 1)
    x_d = tens_linear(p["readin_d"], x_d, 2)
    d0 = disp_tensors(p["disp0"], rc, mask0, rij0)
    d1 = disp_tensors(p["disp1"], rc, mask1, rij1)
    x_a = x_a + d0[0] + d1[0]
    x_v = x_v + d0[1] + d1[1]
    x_d = x_d + d0[2] + d1[2]
    x_a, x_v, x_d = self_tens_prods(p["prods"], x_a, x_v, x_d)
    return local_mlp(p["mlps"], x_a, x_v, x_d)


def init_amino_sub_block(kg, cfg, atoms_per_amino):
    da, dv, dd, ch = cfg["dim_a"], cfg["dim_v"], cfg["dim_d"], cfg["chan"]
    return {"enc0": init_residues_encode(kg, dv, atoms_per_amino),
            "enc1": init_residues_encode(kg, dv, atoms_per_amino),
            "ndisp": init_ndisp_embed(kg, dv),
            "pos_embed": init_pos_embed(kg, dv),
            "readin_a": init_lin_amino_map(kg, da, da),
            "readin_v": init_lin_amino_map(kg, dv, dv),
            "readin_d": init_lin_amino_map(kg, dd, dd),
            "prods": init_self_tens_prods(kg, da, dv, dd, ch),
            "mlps": init_local_mlp(kg, da, dv, dd),
            "convs": init_amino_chain_conv(kg, da, dv, dd),
            "readout_a": init_lin_amino_map(kg, da, da),
            "readout_v": init_lin_amino_map(kg, dv, dv),
            "readout_d": init_lin_amino_map(kg, dd, dd)}


def amino_sub_block(p, cfg, meta, xtup, ytup, pos0tup, pos1tup):
    x_a, x_v, x_d = xtup
    y_a, y_v, y_d = ytup
    pos_0, pos_1 = pos0tup[0], pos1tup[0]
    y_a = y_a + 0.2 * lin_atom_to_amino(p["readin_a"], x_a, meta, 0)
    y_v = y_v + 0.2 * lin_atom_to_amino(p["readin_v"], x_v, meta, 1)
    y_d = y_d + 0.2 * lin_atom_to_amino(p["readin_d"], x_d, meta, 2)
    pos_0_am, d0_v = residues_encode(p["enc0"], pos_0, meta)
    pos_1_am, d1_v = residues_encode(p["enc1"], pos_1, meta)
    y_v = (y_v + d0_v + d1_v + pos_embed(p["pos_embed"], pos_0_am, pos_1_am)
           + ndisp_embed(p["ndisp"], pos_0_am, pos_1_am))
    da, dv, dd = amino_chain_conv(p["convs"], y_a, y_v, y_d)
    y_a, y_v, y_d = y_a + da, y_v + dv, y_d + dd
    da, dv, dd = local_mlp(p["mlps"], *self_tens_prods(p["prods"], y_a, y_v, y_d))
    y_a, y_v, y_d = y_a + da, y_v + dv, y_d + dd
    dxtup = (0.2 * lin_amino_to_atom(p["readout_a"], y_a, meta, 0),
             0.2 * lin_amino_to_atom(p["readout_v"], y_v, meta, 1),
             0.2 * lin_amino_to_atom(p["readout_d"], y_d, meta, 2))
    return dxtup, (y_a, y_v, y_d)


def init_block(kg, cfg, atoms_per_amino):
    da, dv, dd, ch = cfg["dim_a"], cfg["dim_v"], cfg["dim_d"], cfg["chan"]
    return {"pos_embed": init_pos_embed(kg, dv),
            "res_embed": init_residue_atom_embed(kg, da),
            "sub_block": init_sub_block(kg, cfg),
            "messages_0": init_messages(kg, da, dv, dd, ch),
            "messages_1": init_messages(kg, da, dv, dd, ch),
            "amino_sub_block": init_amino_sub_block(kg, cfg, atoms_per_amino),
            "lin_push_pos_1": init_tens_linear(kg, dv, 1),
            "rand_lin_a": init_tens_linear(kg, da, da),
            "rand_lin_v": init_tens_linear(kg, dv, dv),
            "rand_lin_d": init_tens_linear(kg, dd, dd)}


def block_forward(p, cfg, randgen, tup):
    E, contexttup, (x_a, x_v, x_d), ytup, pos0tup, pos1tup = tup
    box, meta = contexttup
    rc = cfg["r_cut"]
    pos_0, mask0, rij0 = pos0tup
    pos_1, mask1, rij1 = pos1tup
    if mask0 is None:
        mask0, rij0 = graph_setup(rc, box, pos_0)
        pos0tup = (pos_0, mask0, rij0)
    if mask1 is None:
        mask1, rij1 = graph_setup(rc, box, pos_1)
        pos1tup = (pos_1, mask1, rij1)
    # generator path (is_disc=False): inject noise
    x_a = x_a + tens_linear(p["rand_lin_a"], randgen.randn(0, x_a.shape), 0)
    x_v = x_v + tens_linear(p["rand_lin_v"], randgen.randn(1, x_v.shape[:-1]), 1)
    x_d = x_d + tens_linear(p["rand_lin_d"], randgen.randn(2, x_d.shape[:-2]), 2)
    dxa, dxv, dxd = sub_block(p["sub_block"], cfg,
                              (x_a + residue_atom_embed(p["res_embed"], meta),
                               x_v + pos_embed(p["pos_embed"], pos_0, pos_1),
                               x_d),
                              pos0tup, pos1tup)
    x_a, x_v, x_d = x_a + dxa, x_v + dxv, x_d + dxd
    m0 = messages(p["messages_0"], rc, mask0, rij0, x_a, x_v, x_d)
    m1 = messages(p["messages_1"], rc, mask1, rij1, x_a, x_v, x_d)
    x_a, x_v, x_d = x_a + m0[0] + m1[0], x_v + m0[1] + m1[1], x_d + m0[2] + m1[2]
    dxtup, ytup = amino_sub_block(p["amino_sub_block"], cfg, meta,
                                  (x_a, x_v, x_d), ytup, pos0tup, pos1tup)
    x_a, x_v, x_d = x_a + dxtup[0], x_v + dxtup[1], x_d + dxtup[2]
    # pos_1_mutable=True
    pos_1 = pos_1 + jnp.squeeze(tens_linear(p["lin_push_pos_1"], x_v, 1), axis=-2)
    pos1tup = (pos_1, None, None)
    return (E, contexttup, (x_a, x_v, x_d), ytup, pos0tup, pos1tup)


def init_generator(kg, cfg, atoms_per_amino):
    return {"blocks": [init_block(kg, cfg, atoms_per_amino) for _ in range(cfg["depth"])]}


def generator_forward(params, cfg, randgen, pos_0, box, meta):
    batch, atoms, _ = pos_0.shape
    dim_a, dim_v, dim_d = cfg["dim_a"], cfg["dim_v"], cfg["dim_d"]
    aminos = meta["n_aminos"]
    pos_1 = pos_0
    if cfg.get("gen_initial_noise") is not None:
        pos_1 = pos_1 + cfg["gen_initial_noise"] * randgen.randn(1, pos_0.shape[:-1])
    xtup = (jnp.zeros((batch, atoms, dim_a), jnp.float32),
            jnp.zeros((batch, atoms, dim_v, 3), jnp.float32),
            jnp.zeros((batch, atoms, dim_d, 3, 3), jnp.float32))
    ytup = (jnp.zeros((batch, aminos, dim_a), jnp.float32),
            jnp.zeros((batch, aminos, dim_v, 3), jnp.float32),
            jnp.zeros((batch, aminos, dim_d, 3, 3), jnp.float32))
    tup = (0.0, (box, meta), xtup, ytup, (pos_0, None, None), (pos_1, None, None))
    for bp in params["blocks"]:
        tup = block_forward(bp, cfg, randgen, tup)
    return tup[5][0]


# ----------------------------------------------------------------------------
# Demo
# ----------------------------------------------------------------------------
if __name__ == "__main__":
    cfg = dict(dim_a=16, dim_v=8, dim_d=8, chan=8, depth=2, r_cut=3.0,
               gen_initial_noise=0.05)
    batch, n_aminos, atoms_per_amino = 2, 4, 3
    atoms = n_aminos * atoms_per_amino

    key = jax.random.PRNGKey(0)
    pos_0 = 10.0 * jax.random.uniform(key, (batch, atoms, 3), dtype=jnp.float32)
    box = jnp.array([10.0, 10.0, 10.0], dtype=jnp.float32)
    meta = {"n_aminos": n_aminos,
            "atoms_per_amino": atoms_per_amino,
            "seq": list(range(n_aminos)),
            "amino_index": jnp.repeat(jnp.arange(n_aminos), atoms_per_amino),
            "atom_type": jnp.arange(atoms) % 8}

    kg = KeyGen(42)
    params = init_generator(kg, cfg, atoms_per_amino)
    randgen = TensorRandGen(7)

    out = generator_forward(params, cfg, randgen, pos_0, box, meta)
    out = jax.block_until_ready(out)
    assert out.shape == (batch, atoms, 3), out.shape
    assert bool(jnp.all(jnp.isfinite(out)))
    print("KERNEL_OK")
</pallas_src>

<mosaic_0001>
module attributes {stable_mosaic.version = 11 : i64} {
  func.func @_linear_kernel(%arg0: i32, %arg1: memref<24x16xf32, #tpu.memory_space<vmem>>, %arg2: memref<16x16xf32, #tpu.memory_space<vmem>>, %arg3: memref<24x16xf32, #tpu.memory_space<vmem>>) attributes {dimension_semantics = [#tpu.dimension_semantics<parallel>], iteration_bounds = array<i64: 1>, scalar_prefetch = 0 : i64, scratch_operands = 0 : i64, tpu.core_type = #tpu.core_type<tc>, window_params = [{transform_indices = @transform_0, window_bounds = array<i64: 24, 16>}, {pipeline_mode = #tpu.pipeline_mode<synchronous>, transform_indices = @transform_1, window_bounds = array<i64: 16, 16>}, {transform_indices = @transform_2, window_bounds = array<i64: 24, 16>}]} {
    %c0 = arith.constant 0 : index
    %c0_0 = arith.constant 0 : index
    %0 = vector.load %arg1[%c0, %c0_0] : memref<24x16xf32, #tpu.memory_space<vmem>>, vector<24x16xf32>
    %c0_1 = arith.constant 0 : index
    %c0_2 = arith.constant 0 : index
    %1 = vector.load %arg2[%c0_1, %c0_2] : memref<16x16xf32, #tpu.memory_space<vmem>>, vector<16x16xf32>
    %2 = arith.truncf %0 : vector<24x16xf32> to vector<24x16xbf16>
    %3 = arith.truncf %1 : vector<16x16xf32> to vector<16x16xbf16>
    %cst = arith.constant dense<0.000000e+00> : vector<24x16xf32>
    %4 = tpu.matmul %2, %3, %cst {dimension_numbers = #tpu.dot_dimension_numbers<[1], [0], [0], [1], [0, 0, 1, 1], [], []>} : vector<24x16xbf16>, vector<16x16xbf16>, vector<24x16xf32> -> vector<24x16xf32>
    %c0_3 = arith.constant 0 : index
    %c0_4 = arith.constant 0 : index
    %5 = vector.load %arg3[%c0_3, %c0_4] : memref<24x16xf32, #tpu.memory_space<vmem>>, vector<24x16xf32>
    tpu.vector_store %arg3[%c0_3, %c0_4], %4 {strides = array<i32>} : memref<24x16xf32, #tpu.memory_space<vmem>>, vector<24x16xf32>,
    return
  }
  func.func @transform_0(%arg0: i32) -> (i32, i32) {
    %c0_i32 = arith.constant 0 : i32
    %c0_i32_0 = arith.constant 0 : i32
    return %arg0, %c0_i32 : i32, i32
  }
  func.func @transform_1(%arg0: i32) -> (i32, i32) {
    %c0_i32 = arith.constant 0 : i32
    %c0_i32_0 = arith.constant 0 : i32
    %c0_i32_1 = arith.constant 0 : i32
    return %c0_i32, %c0_i32_0 : i32, i32
  }
  func.func @transform_2(%arg0: i32) -> (i32, i32) {
    %c0_i32 = arith.constant 0 : i32
    %c0_i32_0 = arith.constant 0 : i32
    return %arg0, %c0_i32 : i32, i32
  }
}

</mosaic_0001>

<llo_original>
// kernel: pallas_linear.1
$region0: #{pallas_linear.1}
  #allocation0 [shape = 'u32[]', space=smem, size = 0x4, offset = 0x4, fixed_abs, tag = 'smem constant byte address 0x4 - core index']
  #allocation1 [shape = 'u32[144,128]{1,0:T(1,128)}', space=vmem, size = 0x12000, scoped, tag = 'internal scratch']
  %s0 = inlined_call_operand.vmem [shape: f32[24,16], index: 0, kind: input, shape index: {}]
  %s1 = inlined_call_operand.vmem [shape: f32[16,16], index: 1, kind: input, shape index: {}]
  %s2 = inlined_call_operand.vmem [shape: f32[24,16], index: 2, kind: output, shape index: {}]
  %s3 = sld [smem:[#allocation0]]
  $region18: #{pallas_linear.1} parent=0
    _
  %s5 = ssub.s32 1, %s3
  %s6 = scalar_select 0, %s5, %s3
  // Predicated region
  $region2: #{pallas_linear.1} parent=0 // pred_check
    _
  $region3: #{pallas_linear.1} parent=0 // pred_check_branch
    %8 = sbr.rel (0) target = $region5
  $region4: #{pallas_linear.1} parent=0 // pred_region
    _
  $region5: #{pallas_linear.1} parent=0 // pred_fallthru
    _
  // Predicated region
  $region6: #{pallas_linear.1} parent=0 // pred_check
    _
  $region7: #{pallas_linear.1} parent=0 // pred_check_branch
    %10 = sbr.rel (0) target = $region9
  $region8: #{pallas_linear.1} parent=0 // pred_region
    _
  $region9: #{pallas_linear.1} parent=0 // pred_fallthru
    _
  %v12 = vld [vmem:[%s0] sm:$0xff]
  %v13 = vld [vmem:[%s0 + $0x8] sm:$0xff]
  %v14 = vld [vmem:[%s0 + $0x10] sm:$0xff]
  %v15 = vld [vmem:[%s1] sm:$0xff]
  %v16 = vld [vmem:[%s1 + $0x8] sm:$0xff]
  %v17 = vpack.c.bf16 %v13, %v12
  %v18 = vpack.c.bf16 %v14, %v14
  %v19 = vpack.c.bf16 %v16, %v15
  %vm20 = vcmask 130048
  %v22 = vsel %vm20, %v17, 0
  %v25 = vsel %vm20, %v18, 0
  %27 = vmatprep.subr.bf16.mxu0 0
  %28 = vmatpush1.bf16.msra.mxu0 0
  %29 = vmatprep.subr.bf16.mxu0 0
  %30 = vmatpush1.bf16.msra.mxu0 0
  %31 = vmatprep.subr.bf16.mxu0 0
  %32 = vmatpush1.bf16.msra.mxu0 0
  %33 = vmatprep.subr.bf16.mxu0 0
  %34 = vmatpush1.bf16.msra.mxu0 0
  %35 = vmatprep.subr.bf16.mxu0 0
  %36 = vmatpush1.bf16.msra.mxu0 0
  %37 = vmatprep.subr.bf16.mxu0 0
  %38 = vmatpush1.bf16.msra.mxu0 0
  %39 = vmatprep.subr.bf16.mxu0 0
  %40 = vmatpush1.bf16.msra.mxu0 0
  %41 = vmatprep.subr.bf16.mxu0 0
  %42 = vmatpush1.bf16.msra.mxu0 %v19
  %43 = vmatprep.subr.bf16.mxu0 0
  %44 = vmatpush2.bf16.msra.mxu0 0
  %45 = vmatprep.subr.bf16.mxu0 0
  %46 = vmatpush2.bf16.msra.mxu0 0
  %47 = vmatprep.subr.bf16.mxu0 0
  %48 = vmatpush2.bf16.msra.mxu0 0
  %49 = vmatprep.subr.bf16.mxu0 0
  %50 = vmatpush2.bf16.msra.mxu0 0
  %51 = vmatprep.subr.bf16.mxu0 0
  %52 = vmatpush2.bf16.msra.mxu0 0
  %53 = vmatprep.subr.bf16.mxu0 0
  %54 = vmatpush2.bf16.msra.mxu0 0
  %55 = vmatprep.subr.bf16.mxu0 0
  %56 = vmatpush2.bf16.msra.mxu0 0
  %57 = vmatprep.subr.bf16.mxu0 0
  %58 = vmatpush2.bf16.msra.mxu0 0
  %59 = vmatprep.mubr.bf16.mxu0 0
  %60 = vmatmul.mubr.bf16.gmra.mxu0 %v22
  %v61 = vpop.f32.mrf.mxu0
  %v62 = vadd.f32 0.0, %v61
  %v63 = vpop.f32.mrf.mxu0
  %v64 = vpop.f32.mrf.mxu0
  %v65 = vadd.f32 0.0, %v64
  %v66 = vpop.f32.mrf.mxu0
  %67 = vmatprep.mubr.bf16.mxu0 0
  %68 = vmatmul.mubr.bf16.gmra.mxu0 %v25
  %v69 = vpop.f32.mrf.mxu0
  %v70 = vadd.f32 0.0, %v69
  %v71 = vpop.f32.mrf.mxu0
  %v72 = vpop.f32.mrf.mxu0
  %v73 = vpop.f32.mrf.mxu0
  %74 = vdwg.mxu0
  %75 = vst.msk [vmem:[%s2] sm:$0xff] %vm20, %v62
  %76 = vst.msk [vmem:[%s2 + $0x8] sm:$0xff] %vm20, %v65
  %77 = vst.msk [vmem:[%s2 + $0x10] sm:$0xff] %vm20, %v70
  // Predicated region
  $region10: #{pallas_linear.1} parent=0 // pred_check
    _
  $region11: #{pallas_linear.1} parent=0 // pred_check_branch
    %79 = sbr.rel (0) target = $region13
  $region12: #{pallas_linear.1} parent=0 // pred_region
    _
  $region13: #{pallas_linear.1} parent=0 // pred_fallthru
    _
  // Predicated region
  $region14: #{pallas_linear.1} parent=0 // pred_check
    _
  $region15: #{pallas_linear.1} parent=0 // pred_check_branch
    %81 = sbr.rel (0) target = $region17
  $region16: #{pallas_linear.1} parent=0 // pred_region
    _
  $region17: #{pallas_linear.1} parent=0 // pred_fallthru
    _

</llo_original>
